<compile_context>
chip_gen: v7x
topology: tpu7x:2x2x1
jax: 0.10.0
libtpu: 0.0.40
codegen_flags: <defaults>
</compile_context>

<pallas_src>
import functools
import math

import jax
import jax.numpy as jnp
from jax import lax
from jax.experimental import pallas as pl
from jax.experimental.pallas import tpu as pltpu


# ----------------------------------------------------------------------------
# helpers
# ----------------------------------------------------------------------------
def _pick_tile(total, target):
    """Largest multiple of 8 that divides `total` and is <= target (else total)."""
    t = min(target, total)
    for c in range(t - t % 8, 7, -8):
        if total % c == 0:
            return c
    return total


def _pick_chunk(total, target=512, mult=128):
    """Largest multiple of `mult` dividing `total` and <= target (else total)."""
    if total <= target:
        return total
    best = None
    c = mult
    while c <= target:
        if total % c == 0:
            best = c
        c += mult
    return best if best is not None else total


# ----------------------------------------------------------------------------
# generic token-wise linear:  y = x @ w + b   (bf16 MXU operands, f32 accumulate)
# ----------------------------------------------------------------------------
def _linear_kernel(x_ref, w_ref, b_ref, o_ref):
    x = x_ref[...].astype(jnp.bfloat16)
    w = w_ref[...].astype(jnp.bfloat16)
    o_ref[...] = (jnp.dot(x, w, preferred_element_type=jnp.float32)
                  + b_ref[...]).astype(o_ref.dtype)


def pallas_linear(x2d, w, b, *, tm_target=512):
    T, Cin = x2d.shape
    Cout = w.shape[1]
    tm = _pick_tile(T, tm_target)
    cost = pl.CostEstimate(
        flops=2 * T * Cin * Cout,
        transcendentals=0,
        bytes_accessed=4 * (T * Cin + Cin * Cout + Cout + T * Cout),
    )
    return pl.pallas_call(
        _linear_kernel,
        out_shape=jax.ShapeDtypeStruct((T, Cout), x2d.dtype),
        grid_spec=pltpu.PrefetchScalarGridSpec(
            num_scalar_prefetch=0,
            grid=(T // tm,),
            in_specs=[
                pl.BlockSpec((tm, Cin), lambda i: (i, 0)),
                pl.BlockSpec((Cin, Cout), lambda i: (0, 0)),
                pl.BlockSpec((1, Cout), lambda i: (0, 0)),
            ],
            out_specs=pl.BlockSpec((tm, Cout), lambda i: (i, 0)),
        ),
        compiler_params=pltpu.CompilerParams(dimension_semantics=("parallel",)),
        cost_estimate=cost,
    )(x2d, w, b.reshape(1, Cout))


# ----------------------------------------------------------------------------
# fused offset + mask projections (per-group softmax over P points)
# mask written with one full-width store; matmuls in bf16.
# ----------------------------------------------------------------------------
def _offset_mask_kernel(x_ref, wo_ref, bo_ref, wm_ref, bm_ref,
                        off_ref, msk_ref, *, group, points):
    x = x_ref[...].astype(jnp.bfloat16)
    off_ref[...] = (jnp.dot(x, wo_ref[...].astype(jnp.bfloat16),
                            preferred_element_type=jnp.float32)
                    + bo_ref[...]).astype(off_ref.dtype)

    logits = (jnp.dot(x, wm_ref[...].astype(jnp.bfloat16),
                      preferred_element_type=jnp.float32) + bm_ref[...])
    GP = group * points
    col = lax.broadcasted_iota(jnp.int32, (1, GP), 1)

    # assemble per-group max / sum at full width -> one exp, one divide, one store
    m_full = jnp.zeros_like(logits)
    for g in range(group):
        mg = jnp.max(logits[:, g * points:(g + 1) * points], axis=-1, keepdims=True)
        in_g = (col >= g * points) & (col < (g + 1) * points)
        m_full = jnp.where(in_g, mg, m_full)
    e = jnp.exp(logits - m_full)
    s_full = jnp.zeros_like(logits)
    for g in range(group):
        sg = jnp.sum(e[:, g * points:(g + 1) * points], axis=-1, keepdims=True)
        in_g = (col >= g * points) & (col < (g + 1) * points)
        s_full = jnp.where(in_g, sg, s_full)
    msk_ref[...] = (e / s_full).astype(msk_ref.dtype)


def pallas_offset_mask(x2d, wo, bo, wm, bm, *, group, points, tm_target=512):
    T, Cin = x2d.shape
    Co, Cm = wo.shape[1], wm.shape[1]
    tm = _pick_tile(T, tm_target)
    cost = pl.CostEstimate(
        flops=2 * T * Cin * (Co + Cm),
        transcendentals=T * Cm,
        bytes_accessed=4 * (T * Cin + Cin * (Co + Cm) + Co + Cm + T * (Co + Cm)),
    )
    kernel = functools.partial(_offset_mask_kernel, group=group, points=points)
    return pl.pallas_call(
        kernel,
        out_shape=(
            jax.ShapeDtypeStruct((T, Co), x2d.dtype),
            jax.ShapeDtypeStruct((T, Cm), x2d.dtype),
        ),
        grid_spec=pltpu.PrefetchScalarGridSpec(
            num_scalar_prefetch=0,
            grid=(T // tm,),
            in_specs=[
                pl.BlockSpec((tm, Cin), lambda i: (i, 0)),
                pl.BlockSpec((Cin, Co), lambda i: (0, 0)),
                pl.BlockSpec((1, Co), lambda i: (0, 0)),
                pl.BlockSpec((Cin, Cm), lambda i: (0, 0)),
                pl.BlockSpec((1, Cm), lambda i: (0, 0)),
            ],
            out_specs=(
                pl.BlockSpec((tm, Co), lambda i: (i, 0)),
                pl.BlockSpec((tm, Cm), lambda i: (i, 0)),
            ),
        ),
        compiler_params=pltpu.CompilerParams(dimension_semantics=("parallel",)),
        cost_estimate=cost,
    )(x2d, wo, bo.reshape(1, Co), wm, bm.reshape(1, Cm))


# ----------------------------------------------------------------------------
# fused depthwise KxK conv + LayerNorm(C) + GELU, entirely in NHWC
# (the torch module's to_channels_first/last permutes vanish in this layout)
# ----------------------------------------------------------------------------
def _erf_poly(z):
    # Abramowitz & Stegun 7.1.26, |err| < 1.5e-7 (z >= 0)
    t = 1.0 / (1.0 + 0.3275911 * z)
    poly = t * (0.254829592 + t * (-0.284496736 + t * (1.421413741
                + t * (-1.453152027 + t * 1.061405429))))
    return 1.0 - poly * jnp.exp(-z * z)


def _gelu_exact(x):
    z = jnp.abs(x) * (1.0 / math.sqrt(2.0))
    e = _erf_poly(z)
    return 0.5 * x * (1.0 + jnp.where(x >= 0.0, e, -e))


def _dw_ln_gelu_kernel(xp_ref, w_ref, b_ref, g_ref, bt_ref, o_ref, *, H, W, K, eps):
    xp = xp_ref[0].astype(jnp.float32)          # (H+K-1, W+K-1, C) zero-padded input
    C = xp.shape[-1]
    acc = jnp.zeros((H, W, C), jnp.float32) + b_ref[...]
    for dh in range(K):
        for dw in range(K):
            wk = w_ref[dh * K + dw:dh * K + dw + 1, :]       # (1, C)
            acc = acc + xp[dh:dh + H, dw:dw + W, :] * wk
    mu = jnp.mean(acc, axis=-1, keepdims=True)
    var = jnp.mean(jnp.square(acc - mu), axis=-1, keepdims=True)
    y = (acc - mu) * lax.rsqrt(var + eps) * g_ref[...] + bt_ref[...]
    o_ref[0] = _gelu_exact(y).astype(o_ref.dtype)


def pallas_dw_ln_gelu(x, w_dw, b_dw, ln_g, ln_b, *, K, eps):
    # TODO(synk): halo row-tiling + in-kernel padding for very large feature maps.
    N, H, W, C = x.shape
    pd = (K - 1) // 2
    xp = jnp.pad(x, ((0, 0), (pd, pd), (pd, pd), (0, 0)))
    Hp, Wp = H + 2 * pd, W + 2 * pd
    cost = pl.CostEstimate(
        flops=2 * N * H * W * C * K * K + 12 * N * H * W * C,
        transcendentals=2 * N * H * W * C,
        bytes_accessed=4 * (N * Hp * Wp * C + N * H * W * C + (K * K + 3) * C),
    )
    kernel = functools.partial(_dw_ln_gelu_kernel, H=H, W=W, K=K, eps=eps)
    return pl.pallas_call(
        kernel,
        out_shape=jax.ShapeDtypeStruct((N, H, W, C), x.dtype),
        grid_spec=pltpu.PrefetchScalarGridSpec(
            num_scalar_prefetch=0,
            grid=(N,),
            in_specs=[
                pl.BlockSpec((1, Hp, Wp, C), lambda n: (n, 0, 0, 0)),
                pl.BlockSpec((K * K, C), lambda n: (0, 0)),
                pl.BlockSpec((1, C), lambda n: (0, 0)),
                pl.BlockSpec((1, C), lambda n: (0, 0)),
                pl.BlockSpec((1, C), lambda n: (0, 0)),
            ],
            out_specs=pl.BlockSpec((1, H, W, C), lambda n: (n, 0, 0, 0)),
        ),
        compiler_params=pltpu.CompilerParams(dimension_semantics=("parallel",)),
        cost_estimate=cost,
    )(xp, w_dw, b_dw.reshape(1, C), ln_g.reshape(1, C), ln_b.reshape(1, C))


# ----------------------------------------------------------------------------
# deformable sampling core + fused output projection
# ----------------------------------------------------------------------------
def _dcnv3_core_kernel(x_ref, offx_ref, offy_ref, msk_ref, wo_ref, bo_ref, o_ref, *,
                       H, W, K, stride, pad, dil, group, gc, offset_scale, TQ, CH):
    HW = H * W
    P = K * K
    GP = group * P
    C = group * gc
    half = (dil * (K - 1)) // 2
    f32 = jnp.float32

    x_bf = x_ref[0].astype(jnp.bfloat16)         # (HW, C) values being sampled
    offx = offx_ref[0].astype(f32)               # (TQ, GP)  (constant taps folded in bias)
    offy = offy_ref[0].astype(f32)
    msk = msk_ref[0].astype(f32)                 # (TQ, GP)

    # absolute output-token coordinates of this tile (unpadded pixel coords)
    tok = pl.program_id(1) * TQ + lax.broadcasted_iota(jnp.int32, (TQ, 1), 0)
    out_h = tok // W
    out_w = tok % W
    base_x = (out_w * stride).astype(f32) + float(half - pad)
    base_y = (out_h * stride).astype(f32) + float(half - pad)

    # vectorized sampling coordinates / bilinear weights for ALL (group, point) taps
    fx = base_x + offx * offset_scale            # (TQ, GP)
    fy = base_y + offy * offset_scale
    x0f = jnp.floor(fx)
    y0f = jnp.floor(fy)
    tx = fx - x0f
    ty = fy - y0f
    x0 = x0f.astype(jnp.int32)
    y0 = y0f.astype(jnp.int32)

    vx0 = (x0 >= 0) & (x0 < W)
    vx1 = (x0 >= -1) & (x0 < W - 1)
    vy0 = (y0 >= 0) & (y0 < H)
    vy1 = (y0 >= -1) & (y0 < H - 1)

    # per-corner weights (mask * bilinear), zeroed for out-of-bounds corners
    w00 = jnp.where(vy0 & vx0, msk * (1.0 - ty) * (1.0 - tx), 0.0)
    w01 = jnp.where(vy0 & vx1, msk * (1.0 - ty) * tx, 0.0)
    w10 = jnp.where(vy1 & vx0, msk * ty * (1.0 - tx), 0.0)
    w11 = jnp.where(vy1 & vx1, msk * ty * tx, 0.0)
    flat00 = y0 * W + x0                         # (TQ, GP) top-left flat index

    colC = lax.broadcasted_iota(jnp.int32, (1, C), 1)
    acc = jnp.zeros((TQ, C), f32)

    # HW processed in lane chunks so S never exceeds ~TQ*CH f32 of live state
    for s in range(0, HW, CH):
        lane = lax.broadcasted_iota(jnp.int32, (TQ, CH), 1) + s
        xc = x_bf[s:s + CH, :]                   # (CH, C) bf16
        for g in range(group):
            S = jnp.zeros((TQ, CH), f32)
            for p in range(P):
                c = g * P + p
                f0 = flat00[:, c:c + 1]
                S = S + jnp.where(lane == f0, w00[:, c:c + 1], 0.0)
                S = S + jnp.where(lane == f0 + 1, w01[:, c:c + 1], 0.0)
                S = S + jnp.where(lane == f0 + W, w10[:, c:c + 1], 0.0)
                S = S + jnp.where(lane == f0 + (W + 1), w11[:, c:c + 1], 0.0)
            # full-C-width matmul (same MXU cycles as a gc-wide one for C <= MXU width),
            # result masked to this group's channel slice and accumulated lane-dense.
            part = jnp.dot(S.astype(jnp.bfloat16), xc,
                           preferred_element_type=jnp.float32)   # (TQ, C)
            in_g = (colC >= g * gc) & (colC < (g + 1) * gc)
            acc = acc + jnp.where(in_g, part, 0.0)

    # fused output projection + single lane-dense store of the tile
    y = (jnp.dot(acc.astype(jnp.bfloat16), wo_ref[...].astype(jnp.bfloat16),
                 preferred_element_type=jnp.float32) + bo_ref[...])
    o_ref[0] = y.astype(o_ref.dtype)


def pallas_dcnv3_core(x_flat, off_x, off_y, mask, w_out, b_out, *,
                      H, W, K, stride, pad, dil, group, gc, offset_scale):
    # x_flat: (N, H*W, C); off_x/off_y/mask: (N, H*W, G*P); w_out: (C, C)
    N, HW, C = x_flat.shape
    P = K * K
    GP = group * P
    TQ = _pick_tile(HW, 128)
    CH = _pick_chunk(HW, target=512, mult=128)

    cost = pl.CostEstimate(
        flops=2 * N * HW * HW * C * group + 2 * N * HW * C * C + 60 * N * HW * GP,
        transcendentals=0,
        bytes_accessed=4 * N * HW * (2 * C + 3 * GP) + 4 * (C * C + C),
    )
    kernel = functools.partial(
        _dcnv3_core_kernel, H=H, W=W, K=K, stride=stride, pad=pad, dil=dil,
        group=group, gc=gc, offset_scale=offset_scale, TQ=TQ, CH=CH)

    # VMEM budget from actual block sizes (double-buffered) + live temporaries,
    # capped at the v7x per-core physical 64 MiB.
    block_bytes = 4 * (HW * C + 3 * TQ * GP + C * C + C + TQ * C)
    temp_bytes = 4 * (TQ * CH + 10 * TQ * GP + 2 * TQ * C) + 2 * HW * C
    vmem_limit = int(min(64 << 20, max(16 << 20,
                                       2 * block_bytes + temp_bytes + (8 << 20))))

    return pl.pallas_call(
        kernel,
        out_shape=jax.ShapeDtypeStruct((N, HW, C), x_flat.dtype),
        grid_spec=pltpu.PrefetchScalarGridSpec(
            num_scalar_prefetch=0,
            grid=(N, HW // TQ),
            in_specs=[
                pl.BlockSpec((1, HW, C), lambda n, q: (n, 0, 0)),
                pl.BlockSpec((1, TQ, GP), lambda n, q: (n, q, 0)),
                pl.BlockSpec((1, TQ, GP), lambda n, q: (n, q, 0)),
                pl.BlockSpec((1, TQ, GP), lambda n, q: (n, q, 0)),
                pl.BlockSpec((C, C), lambda n, q: (0, 0)),
                pl.BlockSpec((1, C), lambda n, q: (0, 0)),
            ],
            out_specs=pl.BlockSpec((1, TQ, C), lambda n, q: (n, q, 0)),
        ),
        compiler_params=pltpu.CompilerParams(
            dimension_semantics=("parallel", "parallel"),
            vmem_limit_bytes=vmem_limit,
        ),
        cost_estimate=cost,
    )(x_flat, off_x, off_y, mask, w_out, b_out.reshape(1, C))


# ----------------------------------------------------------------------------
# full DCNv3_ forward (NHWC in, NHWC out)
# ----------------------------------------------------------------------------
def dcnv3_forward(x, params, *, kernel_size=3, dw_kernel_size=None, stride=1, pad=1,
                  dilation=1, group=4, offset_scale=1.0, ln_eps=1e-6):
    N, H, W, C = x.shape
    assert C % group == 0
    gc = C // group
    K = kernel_size
    P = K * K
    GP = group * P
    dw_kernel_size = dw_kernel_size if dw_kernel_size is not None else kernel_size
    # TODO(synk): stride > 1 output grid not implemented (module default stride=1).
    assert stride == 1
    T = N * H * W
    HW = H * W

    x_tok = x.reshape(T, C)

    # 1) input_proj
    x_proj = pallas_linear(x_tok, params["w_in"], params["b_in"])

    # 2) depthwise conv + LN + GELU on the original input, pure NHWC (no NCHW copy)
    x1 = pallas_dw_ln_gelu(x, params["w_dw"], params["b_dw"],
                           params["ln_g"], params["ln_b"],
                           K=dw_kernel_size, eps=ln_eps)
    x1_tok = x1.reshape(T, C)

    # 3) offset + mask(+softmax).  The offset weights/bias are de-interleaved into
    #    (dx | dy) planes and the constant sampling-grid taps are folded into the
    #    offset bias so the core kernel gets lane-dense offset planes.
    half = (dilation * (K - 1)) // 2
    tap = jnp.arange(K, dtype=jnp.float32) * dilation - half
    grid_x = jnp.tile(jnp.repeat(tap, K), group)   # p = a*K + b ; x follows a
    grid_y = jnp.tile(jnp.tile(tap, K), group)     # y follows b
    w_off = params["w_off"].reshape(C, GP, 2).transpose(0, 2, 1).reshape(C, 2 * GP)
    b_off = params["b_off"].reshape(GP, 2).T.reshape(2 * GP)
    b_off = b_off + jnp.concatenate([grid_x, grid_y])

    off_tok, mask_tok = pallas_offset_mask(
        x1_tok, w_off, b_off, params["w_msk"], params["b_msk"], group=group, points=P)
    off_x = off_tok[:, :GP].reshape(N, HW, GP)
    off_y = off_tok[:, GP:].reshape(N, HW, GP)
    mask3 = mask_tok.reshape(N, HW, GP)

    # 4) deformable sampling core with the output projection fused in
    out = pallas_dcnv3_core(
        x_proj.reshape(N, HW, C), off_x, off_y, mask3,
        params["w_out"], params["b_out"],
        H=H, W=W, K=K, stride=stride, pad=pad, dil=dilation,
        group=group, gc=gc, offset_scale=offset_scale)

    # TODO(synk): center_feature_scale branch (module default False) not implemented.
    return out.reshape(N, H, W, C)


# ----------------------------------------------------------------------------
# pure-JAX reference (mirrors the torch module, independent gather-based core)
# ----------------------------------------------------------------------------
def _dcnv3_core_ref(x, offset, mask, K, stride, pad, dil, group, gc, scale):
    N, H, W, C = x.shape
    xp = jnp.pad(x, ((0, 0), (pad, pad), (pad, pad), (0, 0)))
    Hi, Wi = H + 2 * pad, W + 2 * pad
    Ho, Wo = offset.shape[1], offset.shape[2]
    P = K * K
    half = (dil * (K - 1)) // 2

    ref_x = (half + 0.5 + jnp.arange(Wo, dtype=jnp.float32) * stride) / Wi
    ref_y = (half + 0.5 + jnp.arange(Ho, dtype=jnp.float32) * stride) / Hi
    tap = jnp.arange(K, dtype=jnp.float32) * dil - half
    grid_x = jnp.repeat(tap, K) / Wi          # p = a*K + b, x follows a
    grid_y = jnp.tile(tap, K) / Hi            # y follows b

    off = offset.reshape(N, Ho, Wo, group, P, 2)
    loc_x = ref_x[None, None, :, None, None] + grid_x * scale + off[..., 0] * scale / Wi
    loc_y = ref_y[None, :, None, None, None] + grid_y * scale + off[..., 1] * scale / Hi
    ix = loc_x * Wi - 0.5                      # grid_sample align_corners=False
    iy = loc_y * Hi - 0.5
    x0 = jnp.floor(ix)
    y0 = jnp.floor(iy)
    tx = ix - x0
    ty = iy - y0

    xpg = xp.reshape(N, Hi, Wi, group, gc)
    n_idx = jnp.arange(N).reshape(N, 1, 1, 1, 1)
    g_idx = jnp.arange(group).reshape(1, 1, 1, group, 1)

    def corner(yc, xc, w):
        yi = yc.astype(jnp.int32)
        xi = xc.astype(jnp.int32)
        valid = (yi >= 0) & (yi < Hi) & (xi >= 0) & (xi < Wi)
        yi = jnp.clip(yi, 0, Hi - 1)
        xi = jnp.clip(xi, 0, Wi - 1)
        v = xpg[n_idx, yi, xi, g_idx]                         # (N,Ho,Wo,G,P,gc)
        return v * (w * valid.astype(w.dtype))[..., None]

    samp = (corner(y0, x0, (1 - ty) * (1 - tx)) + corner(y0, x0 + 1, (1 - ty) * tx)
            + corner(y0 + 1, x0, ty * (1 - tx)) + corner(y0 + 1, x0 + 1, ty * tx))
    m = mask.reshape(N, Ho, Wo, group, P)
    out = (samp * m[..., None]).sum(axis=4)
    return out.reshape(N, Ho, Wo, group * gc)


def dcnv3_forward_ref(x, params, *, kernel_size=3, dw_kernel_size=None, stride=1, pad=1,
                      dilation=1, group=4, offset_scale=1.0, ln_eps=1e-6):
    N, H, W, C = x.shape
    gc = C // group
    P = kernel_size * kernel_size
    dw_kernel_size = dw_kernel_size if dw_kernel_size is not None else kernel_size
    T = N * H * W

    x_proj = (x.reshape(T, C) @ params["w_in"] + params["b_in"]).reshape(N, H, W, C)

    pd = (dw_kernel_size - 1) // 2
    xp = jnp.pad(x, ((0, 0), (pd, pd), (pd, pd), (0, 0)))
    acc = jnp.zeros((N, H, W, C), jnp.float32) + params["b_dw"]
    for dh in range(dw_kernel_size):
        for dw in range(dw_kernel_size):
            acc = acc + xp[:, dh:dh + H, dw:dw + W, :] * params["w_dw"][dh * dw_kernel_size + dw]
    mu = acc.mean(-1, keepdims=True)
    var = ((acc - mu) ** 2).mean(-1, keepdims=True)
    x1 = (acc - mu) * lax.rsqrt(var + ln_eps) * params["ln_g"] + params["ln_b"]
    x1 = jax.nn.gelu(x1, approximate=False)        # torch nn.GELU() (exact erf)

    x1_tok = x1.reshape(T, C)
    offset = (x1_tok @ params["w_off"] + params["b_off"]).reshape(N, H, W, group * P * 2)
    mlog = (x1_tok @ params["w_msk"] + params["b_msk"]).reshape(N, H, W, group, P)
    mask = jax.nn.softmax(mlog, axis=-1).reshape(N, H, W, group * P)

    core = _dcnv3_core_ref(x_proj, offset, mask, kernel_size, stride, pad, dilation,
                           group, gc, offset_scale)
    out = core.reshape(T, C) @ params["w_out"] + params["b_out"]
    return out.reshape(N, H, W, C)


if __name__ == "__main__":
    N, H, W, C = 2, 16, 16, 32
    group, kernel_size = 4, 3
    P = kernel_size * kernel_size

    key = jax.random.PRNGKey(0)
    ks = jax.random.split(key, 13)

    def rnd(k, shape, s):
        return jax.random.normal(k, shape, dtype=jnp.float32) * s

    # NOTE: the torch module zero-inits the offset/mask weights; small random values
    # are used here so the deformable-sampling path is exercised non-trivially.
    params = {
        "w_in":  rnd(ks[0], (C, C), 0.2),
        "b_in":  rnd(ks[1], (C,), 0.1),
        "w_dw":  rnd(ks[2], (kernel_size * kernel_size, C), 0.2),
        "b_dw":  rnd(ks[3], (C,), 0.1),
        "ln_g":  1.0 + rnd(ks[4], (C,), 0.1),
        "ln_b":  rnd(ks[5], (C,), 0.1),
        "w_off": rnd(ks[6], (C, group * P * 2), 0.05),
        "b_off": rnd(ks[7], (group * P * 2,), 0.05),
        "w_msk": rnd(ks[8], (C, group * P), 0.2),
        "b_msk": rnd(ks[9], (group * P,), 0.1),
        "w_out": rnd(ks[10], (C, C), 0.2),
        "b_out": rnd(ks[11], (C,), 0.1),
    }
    x = jax.random.normal(ks[12], (N, H, W, C), dtype=jnp.float32)

    out = dcnv3_forward(x, params, kernel_size=kernel_size, dw_kernel_size=kernel_size,
                        stride=1, pad=1, dilation=1, group=group, offset_scale=1.0)
    out = jax.block_until_ready(out)
    assert out.shape == (N, H, W, C), out.shape

    ref = dcnv3_forward_ref(x, params, kernel_size=kernel_size, dw_kernel_size=kernel_size,
                            stride=1, pad=1, dilation=1, group=group, offset_scale=1.0)
    ref = jax.block_until_ready(ref)

    # bf16 MXU operands (f32 accumulation) -> compare with bf16-appropriate tolerance
    diff = out - ref
    max_err = float(jnp.max(jnp.abs(diff)))
    rel_fro = float(jnp.linalg.norm(diff.ravel()) / (jnp.linalg.norm(ref.ravel()) + 1e-12))
    assert max_err < 1.5e-1 and rel_fro < 3e-2, f"max abs err {max_err}, rel fro {rel_fro}"

    print("KERNEL_OK")
</pallas_src>

<mosaic_0001>
module attributes {stable_mosaic.version = 11 : i64} {
  func.func @_linear_kernel(%arg0: i32, %arg1: memref<512x32xf32, #tpu.memory_space<vmem>>, %arg2: memref<32x32xf32, #tpu.memory_space<vmem>>, %arg3: memref<1x32xf32, #tpu.memory_space<vmem>>, %arg4: memref<512x32xf32, #tpu.memory_space<vmem>>) attributes {dimension_semantics = [#tpu.dimension_semantics<parallel>], iteration_bounds = array<i64: 1>, scalar_prefetch = 0 : i64, scratch_operands = 0 : i64, tpu.core_type = #tpu.core_type<tc>, window_params = [{transform_indices = @transform_0, window_bounds = array<i64: 512, 32>}, {pipeline_mode = #tpu.pipeline_mode<synchronous>, transform_indices = @transform_1, window_bounds = array<i64: 32, 32>}, {pipeline_mode = #tpu.pipeline_mode<synchronous>, transform_indices = @transform_2, window_bounds = array<i64: 1, 32>}, {transform_indices = @transform_3, window_bounds = array<i64: 512, 32>}]} {
    %c0 = arith.constant 0 : index
    %c0_0 = arith.constant 0 : index
    %0 = vector.load %arg1[%c0, %c0_0] : memref<512x32xf32, #tpu.memory_space<vmem>>, vector<512x32xf32>
    %1 = arith.truncf %0 : vector<512x32xf32> to vector<512x32xbf16>
    %c0_1 = arith.constant 0 : index
    %c0_2 = arith.constant 0 : index
    %2 = vector.load %arg2[%c0_1, %c0_2] : memref<32x32xf32, #tpu.memory_space<vmem>>, vector<32x32xf32>
    %3 = arith.truncf %2 : vector<32x32xf32> to vector<32x32xbf16>
    %cst = arith.constant dense<0.000000e+00> : vector<512x32xf32>
    %4 = tpu.matmul %1, %3, %cst {dimension_numbers = #tpu.dot_dimension_numbers<[1], [0], [0], [1], [0, 0, 1, 1], [], []>} : vector<512x32xbf16>, vector<32x32xbf16>, vector<512x32xf32> -> vector<512x32xf32>
    %c0_3 = arith.constant 0 : index
    %c0_4 = arith.constant 0 : index
    %5 = vector.load %arg3[%c0_3, %c0_4] : memref<1x32xf32, #tpu.memory_space<vmem>>, vector<1x32xf32>
    %6 = vector.broadcast %5 : vector<1x32xf32> to vector<512x32xf32>
    %7 = arith.addf %4, %6 : vector<512x32xf32>
    %c0_5 = arith.constant 0 : index
    %c0_6 = arith.constant 0 : index
    %8 = vector.load %arg4[%c0_5, %c0_6] : memref<512x32xf32, #tpu.memory_space<vmem>>, vector<512x32xf32>
    tpu.vector_store %arg4[%c0_5, %c0_6], %7 {strides = array<i32>} : memref<512x32xf32, #tpu.memory_space<vmem>>, vector<512x32xf32>,
    return
  }
  func.func @transform_0(%arg0: i32) -> (i32, i32) {
    %c0_i32 = arith.constant 0 : i32
    %c0_i32_0 = arith.constant 0 : i32
    return %arg0, %c0_i32 : i32, i32
  }
  func.func @transform_1(%arg0: i32) -> (i32, i32) {
    %c0_i32 = arith.constant 0 : i32
    %c0_i32_0 = arith.constant 0 : i32
    %c0_i32_1 = arith.constant 0 : i32
    return %c0_i32, %c0_i32_0 : i32, i32
  }
  func.func @transform_2(%arg0: i32) -> (i32, i32) {
    %c0_i32 = arith.constant 0 : i32
    %c0_i32_0 = arith.constant 0 : i32
    %c0_i32_1 = arith.constant 0 : i32
    return %c0_i32, %c0_i32_0 : i32, i32
  }
  func.func @transform_3(%arg0: i32) -> (i32, i32) {
    %c0_i32 = arith.constant 0 : i32
    %c0_i32_0 = arith.constant 0 : i32
    return %arg0, %c0_i32 : i32, i32
  }
}

</mosaic_0001>

<llo_original>
// kernel: tpu_custom_call.1
$region0: #{tpu_custom_call.1}
  #allocation0 [shape = 'u32[]', space=smem, size = 0x4, offset = 0x4, fixed_abs, tag = 'smem constant byte address 0x4 - core index']
  #allocation1 [shape = 'u32[144,128]{1,0:T(1,128)}', space=vmem, size = 0x12000, scoped, tag = 'internal scratch']
  %s0 = inlined_call_operand.vmem [shape: f32[512,32], index: 0, kind: input, shape index: {}]
  %s1 = inlined_call_operand.vmem [shape: f32[32,32], index: 1, kind: input, shape index: {}]
  %s2 = inlined_call_operand.vmem [shape: f32[1,32], index: 2, kind: input, shape index: {}]
  %s3 = inlined_call_operand.vmem [shape: f32[512,32], index: 3, kind: output, shape index: {}]
  %s4 = sld [smem:[#allocation0]]
  $region22: #{tpu_custom_call.1} parent=0
    _
  %s6 = ssub.s32 1, %s4
  %s7 = scalar_select 0, %s6, %s4
  // Predicated region
  $region2: #{tpu_custom_call.1} parent=0 // pred_check
    _
  $region3: #{tpu_custom_call.1} parent=0 // pred_check_branch
    %9 = sbr.rel (0) target = $region5
  $region4: #{tpu_custom_call.1} parent=0 // pred_region
    _
  $region5: #{tpu_custom_call.1} parent=0 // pred_fallthru
    _
  // Predicated region
  $region6: #{tpu_custom_call.1} parent=0 // pred_check
    _
  $region7: #{tpu_custom_call.1} parent=0 // pred_check_branch
    %11 = sbr.rel (0) target = $region9
  $region8: #{tpu_custom_call.1} parent=0 // pred_region
    _
  $region9: #{tpu_custom_call.1} parent=0 // pred_fallthru
    _
  // Predicated region
  $region10: #{tpu_custom_call.1} parent=0 // pred_check
    _
  $region11: #{tpu_custom_call.1} parent=0 // pred_check_branch
    %13 = sbr.rel (0) target = $region13
  $region12: #{tpu_custom_call.1} parent=0 // pred_region
    _
  $region13: #{tpu_custom_call.1} parent=0 // pred_fallthru
    _
  %v15 = vld [vmem:[%s0] sm:$0xff]
  %v16 = vld [vmem:[%s0 + $0x8] sm:$0xff]
  %v17 = vld [vmem:[%s0 + $0x10] sm:$0xff]
  %v18 = vld [vmem:[%s0 + $0x18] sm:$0xff]
  %v19 = vld [vmem:[%s0 + $0x20] sm:$0xff]
  %v20 = vld [vmem:[%s0 + $0x28] sm:$0xff]
  %v21 = vld [vmem:[%s0 + $0x30] sm:$0xff]
  %v22 = vld [vmem:[%s0 + $0x38] sm:$0xff]
  %v23 = vld [vmem:[%s0 + $0x40] sm:$0xff]
  %v24 = vld [vmem:[%s0 + $0x48] sm:$0xff]
  %v25 = vld [vmem:[%s0 + $0x50] sm:$0xff]
  %v26 = vld [vmem:[%s0 + $0x58] sm:$0xff]
  %v27 = vld [vmem:[%s0 + $0x60] sm:$0xff]
  %v28 = vld [vmem:[%s0 + $0x68] sm:$0xff]
  %v29 = vld [vmem:[%s0 + $0x70] sm:$0xff]
  %v30 = vld [vmem:[%s0 + $0x78] sm:$0xff]
  %v31 = vld [vmem:[%s0 + $0x80] sm:$0xff]
  %v32 = vld [vmem:[%s0 + $0x88] sm:$0xff]
  %v33 = vld [vmem:[%s0 + $0x90] sm:$0xff]
  %v34 = vld [vmem:[%s0 + $0x98] sm:$0xff]
  %v35 = vld [vmem:[%s0 + $0xa0] sm:$0xff]
  %v36 = vld [vmem:[%s0 + $0xa8] sm:$0xff]
  %v37 = vld [vmem:[%s0 + $0xb0] sm:$0xff]
  %v38 = vld [vmem:[%s0 + $0xb8] sm:$0xff]
  %v39 = vld [vmem:[%s0 + $0xc0] sm:$0xff]
  %v40 = vld [vmem:[%s0 + $0xc8] sm:$0xff]
  %v41 = vld [vmem:[%s0 + $0xd0] sm:$0xff]
  %v42 = vld [vmem:[%s0 + $0xd8] sm:$0xff]
  %v43 = vld [vmem:[%s0 + $0xe0] sm:$0xff]
  %v44 = vld [vmem:[%s0 + $0xe8] sm:$0xff]
  %v45 = vld [vmem:[%s0 + $0xf0] sm:$0xff]
  %v46 = vld [vmem:[%s0 + $0xf8] sm:$0xff]
  %v47 = vld [vmem:[%s0 + $0x100] sm:$0xff]
  %v48 = vld [vmem:[%s0 + $0x108] sm:$0xff]
  %v49 = vld [vmem:[%s0 + $0x110] sm:$0xff]
  %v50 = vld [vmem:[%s0 + $0x118] sm:$0xff]
  %v51 = vld [vmem:[%s0 + $0x120] sm:$0xff]
  %v52 = vld [vmem:[%s0 + $0x128] sm:$0xff]
  %v53 = vld [vmem:[%s0 + $0x130] sm:$0xff]
  %v54 = vld [vmem:[%s0 + $0x138] sm:$0xff]
  %v55 = vld [vmem:[%s0 + $0x140] sm:$0xff]
  %v56 = vld [vmem:[%s0 + $0x148] sm:$0xff]
  %v57 = vld [vmem:[%s0 + $0x150] sm:$0xff]
  %v58 = vld [vmem:[%s0 + $0x158] sm:$0xff]
  %v59 = vld [vmem:[%s0 + $0x160] sm:$0xff]
  %v60 = vld [vmem:[%s0 + $0x168] sm:$0xff]
  %v61 = vld [vmem:[%s0 + $0x170] sm:$0xff]
  %v62 = vld [vmem:[%s0 + $0x178] sm:$0xff]
  %v63 = vld [vmem:[%s0 + $0x180] sm:$0xff]
  %v64 = vld [vmem:[%s0 + $0x188] sm:$0xff]
  %v65 = vld [vmem:[%s0 + $0x190] sm:$0xff]
  %v66 = vld [vmem:[%s0 + $0x198] sm:$0xff]
  %v67 = vld [vmem:[%s0 + $0x1a0] sm:$0xff]
  %v68 = vld [vmem:[%s0 + $0x1a8] sm:$0xff]
  %v69 = vld [vmem:[%s0 + $0x1b0] sm:$0xff]
  %v70 = vld [vmem:[%s0 + $0x1b8] sm:$0xff]
  %v71 = vld [vmem:[%s0 + $0x1c0] sm:$0xff]
  %v72 = vld [vmem:[%s0 + $0x1c8] sm:$0xff]
  %v73 = vld [vmem:[%s0 + $0x1d0] sm:$0xff]
  %v74 = vld [vmem:[%s0 + $0x1d8] sm:$0xff]
  %v75 = vld [vmem:[%s0 + $0x1e0] sm:$0xff]
  %v76 = vld [vmem:[%s0 + $0x1e8] sm:$0xff]
  %v77 = vld [vmem:[%s0 + $0x1f0] sm:$0xff]
  %v78 = vld [vmem:[%s0 + $0x1f8] sm:$0xff]
  %v79 = vpack.c.bf16 %v16, %v15
  %v80 = vpack.c.bf16 %v18, %v17
  %v81 = vpack.c.bf16 %v20, %v19
  %v82 = vpack.c.bf16 %v22, %v21
  %v83 = vpack.c.bf16 %v24, %v23
  %v84 = vpack.c.bf16 %v26, %v25
  %v85 = vpack.c.bf16 %v28, %v27
  %v86 = vpack.c.bf16 %v30, %v29
  %v87 = vpack.c.bf16 %v32, %v31
  %v88 = vpack.c.bf16 %v34, %v33
  %v89 = vpack.c.bf16 %v36, %v35
  %v90 = vpack.c.bf16 %v38, %v37
  %v91 = vpack.c.bf16 %v40, %v39
  %v92 = vpack.c.bf16 %v42, %v41
  %v93 = vpack.c.bf16 %v44, %v43
  %v94 = vpack.c.bf16 %v46, %v45
  %v95 = vpack.c.bf16 %v48, %v47
  %v96 = vpack.c.bf16 %v50, %v49
  %v97 = vpack.c.bf16 %v52, %v51
  %v98 = vpack.c.bf16 %v54, %v53
  %v99 = vpack.c.bf16 %v56, %v55
  %v100 = vpack.c.bf16 %v58, %v57
  %v101 = vpack.c.bf16 %v60, %v59
  %v102 = vpack.c.bf16 %v62, %v61
  %v103 = vpack.c.bf16 %v64, %v63
  %v104 = vpack.c.bf16 %v66, %v65
  %v105 = vpack.c.bf16 %v68, %v67
  %v106 = vpack.c.bf16 %v70, %v69
  %v107 = vpack.c.bf16 %v72, %v71
  %v108 = vpack.c.bf16 %v74, %v73
  %v109 = vpack.c.bf16 %v76, %v75
  %v110 = vpack.c.bf16 %v78, %v77
  %v111 = vld [vmem:[%s1] sm:$0xff]
  %v112 = vld [vmem:[%s1 + $0x8] sm:$0xff]
  %v113 = vld [vmem:[%s1 + $0x10] sm:$0xff]
  %v114 = vld [vmem:[%s1 + $0x18] sm:$0xff]
  %v115 = vpack.c.bf16 %v112, %v111
  %v116 = vpack.c.bf16 %v114, %v113
  %v117 = vld [vmem:[%s2] sm:$0x1]
  %v119 = vlaneseq
  %v120 = vshrl.u32 %v119, 7
  %v121 = vsub.s32 0, %v120
  %v122 = vrot.slane %v117, %v121
  %vm124 = vcmask 261120
  %v126 = vsel %vm124, %v79, 0
  %v129 = vsel %vm124, %v80, 0
  %v132 = vsel %vm124, %v81, 0
  %v135 = vsel %vm124, %v82, 0
  %v138 = vsel %vm124, %v83, 0
  %v141 = vsel %vm124, %v84, 0
  %v144 = vsel %vm124, %v85, 0
  %v147 = vsel %vm124, %v86, 0
  %v150 = vsel %vm124, %v87, 0
  %v153 = vsel %vm124, %v88, 0
  %v156 = vsel %vm124, %v89, 0
  %v159 = vsel %vm124, %v90, 0
  %v162 = vsel %vm124, %v91, 0
  %v165 = vsel %vm124, %v92, 0
  %v168 = vsel %vm124, %v93, 0
  %v171 = vsel %vm124, %v94, 0
  %v174 = vsel %vm124, %v95, 0
  %v177 = vsel %vm124, %v96, 0
  %v180 = vsel %vm124, %v97, 0
  %v183 = vsel %vm124, %v98, 0
  %v186 = vsel %vm124, %v99, 0
  %v189 = vsel %vm124, %v100, 0
  %v192 = vsel %vm124, %v101, 0
  %v195 = vsel %vm124, %v102, 0
  %v198 = vsel %vm124, %v103, 0
  %v201 = vsel %vm124, %v104, 0
  %v204 = vsel %vm124, %v105, 0
  %v207 = vsel %vm124, %v106, 0
  %v210 = vsel %vm124, %v107, 0
  %v213 = vsel %vm124, %v108, 0
  %v216 = vsel %vm124, %v109, 0
  %v219 = vsel %vm124, %v110, 0
  %221 = vmatprep.subr.bf16.mxu0 0
  %222 = vmatpush1.bf16.msra.mxu0 %v115
  %223 = vmatprep.subr.bf16.mxu0 0
  %224 = vmatpush1.bf16.msra.mxu0 %v116
  %225 = vmatprep.subr.bf16.mxu0 0
  %226 = vmatpush1.bf16.msra.mxu0 0
  %227 = vmatprep.subr.bf16.mxu0 0
  %228 = vmatpush1.bf16.msra.mxu0 0
  %229 = vmatprep.subr.bf16.mxu0 0
  %230 = vmatpush1.bf16.msra.mxu0 0
  %231 = vmatprep.subr.bf16.mxu0 0
  %232 = vmatpush1.bf16.msra.mxu0 0
  %233 = vmatprep.subr.bf16.mxu0 0
  %234 = vmatpush1.bf16.msra.mxu0 0
  %235 = vmatprep.subr.bf16.mxu0 0
  %236 = vmatpush1.bf16.msra.mxu0 0
  %237 = vmatprep.subr.bf16.mxu0 0
  %238 = vmatpush1.bf16.msra.mxu0 0
  %239 = vmatprep.subr.bf16.mxu0 0
  %240 = vmatpush1.bf16.msra.mxu0 0
  %241 = vmatprep.subr.bf16.mxu0 0
  %242 = vmatpush1.bf16.msra.mxu0 0
  %243 = vmatprep.subr.bf16.mxu0 0
  %244 = vmatpush1.bf16.msra.mxu0 0
  %245 = vmatprep.subr.bf16.mxu0 0
  %246 = vmatpush1.bf16.msra.mxu0 0
  %247 = vmatprep.subr.bf16.mxu0 0
  %248 = vmatpush1.bf16.msra.mxu0 0
  %249 = vmatprep.subr.bf16.mxu0 0
  %250 = vmatpush1.bf16.msra.mxu0 0
  %251 = vmatprep.subr.bf16.mxu0 0
  %252 = vmatpush1.bf16.msra.mxu0 0
  %253 = vmatprep.mubr.bf16.mxu0 0
  %254 = vmatmul.mubr.bf16.gmra.mrb[0].mxu0 %v126
  %v255 = vpop.f32.mrb[0].mxu0
  %v256 = vadd.f32 %v122, %v255
  %v257 = vpop.f32.mrb[0].mxu0
  %v258 = vpop.f32.mrb[0].mxu0
  %v259 = vadd.f32 %v122, %v258
  %v260 = vpop.f32.mrb[0].mxu0
  %261 = vmatprep.mubr.bf16.mxu0 0
  %262 = vmatmul.mubr.bf16.gmra.mrb[0].mxu0 %v129
  %v263 = vpop.f32.mrb[0].mxu0
  %v264 = vadd.f32 %v122, %v263
  %v265 = vpop.f32.mrb[0].mxu0
  %v266 = vpop.f32.mrb[0].mxu0
  %v267 = vadd.f32 %v122, %v266
  %v268 = vpop.f32.mrb[0].mxu0
  %269 = vmatprep.mubr.bf16.mxu0 0
  %270 = vmatmul.mubr.bf16.gmra.mrb[0].mxu0 %v132
  %v271 = vpop.f32.mrb[0].mxu0
  %v272 = vadd.f32 %v122, %v271
  %v273 = vpop.f32.mrb[0].mxu0
  %v274 = vpop.f32.mrb[0].mxu0
  %v275 = vadd.f32 %v122, %v274
  %v276 = vpop.f32.mrb[0].mxu0
  %277 = vmatprep.mubr.bf16.mxu0 0
  %278 = vmatmul.mubr.bf16.gmra.mrb[0].mxu0 %v135
  %v279 = vpop.f32.mrb[0].mxu0
  %v280 = vadd.f32 %v122, %v279
  %v281 = vpop.f32.mrb[0].mxu0
  %v282 = vpop.f32.mrb[0].mxu0
  %v283 = vadd.f32 %v122, %v282
  %v284 = vpop.f32.mrb[0].mxu0
  %285 = vmatprep.mubr.bf16.mxu0 0
  %286 = vmatmul.mubr.bf16.gmra.mrb[0].mxu0 %v138
  %v287 = vpop.f32.mrb[0].mxu0
  %v288 = vadd.f32 %v122, %v287
  %v289 = vpop.f32.mrb[0].mxu0
  %v290 = vpop.f32.mrb[0].mxu0
  %v291 = vadd.f32 %v122, %v290
  %v292 = vpop.f32.mrb[0].mxu0
  %293 = vmatprep.mubr.bf16.mxu0 0
  %294 = vmatmul.mubr.bf16.gmra.mrb[0].mxu0 %v141
  %v295 = vpop.f32.mrb[0].mxu0
  %v296 = vadd.f32 %v122, %v295
  %v297 = vpop.f32.mrb[0].mxu0
  %v298 = vpop.f32.mrb[0].mxu0
  %v299 = vadd.f32 %v122, %v298
  %v300 = vpop.f32.mrb[0].mxu0
  %301 = vmatprep.mubr.bf16.mxu0 0
  %302 = vmatmul.mubr.bf16.gmra.mrb[0].mxu0 %v144
  %v303 = vpop.f32.mrb[0].mxu0
  %v304 = vadd.f32 %v122, %v303
  %v305 = vpop.f32.mrb[0].mxu0
  %v306 = vpop.f32.mrb[0].mxu0
  %v307 = vadd.f32 %v122, %v306
  %v308 = vpop.f32.mrb[0].mxu0
  %309 = vmatprep.mubr.bf16.mxu0 0
  %310 = vmatmul.mubr.bf16.gmra.mrb[0].mxu0 %v147
  %v311 = vpop.f32.mrb[0].mxu0
  %v312 = vadd.f32 %v122, %v311
  %v313 = vpop.f32.mrb[0].mxu0
  %v314 = vpop.f32.mrb[0].mxu0
  %v315 = vadd.f32 %v122, %v314
  %v316 = vpop.f32.mrb[0].mxu0
  %317 = vmatprep.mubr.bf16.mxu0 0
  %318 = vmatmul.mubr.bf16.gmra.mrb[0].mxu0 %v150
  %v319 = vpop.f32.mrb[0].mxu0
  %v320 = vadd.f32 %v122, %v319
  %v321 = vpop.f32.mrb[0].mxu0
  %v322 = vpop.f32.mrb[0].mxu0
  %v323 = vadd.f32 %v122, %v322
  %v324 = vpop.f32.mrb[0].mxu0
  %325 = vmatprep.mubr.bf16.mxu0 0
  %326 = vmatmul.mubr.bf16.gmra.mrb[0].mxu0 %v153
  %v327 = vpop.f32.mrb[0].mxu0
  %v328 = vadd.f32 %v122, %v327
  %v329 = vpop.f32.mrb[0].mxu0
  %v330 = vpop.f32.mrb[0].mxu0
  %v331 = vadd.f32 %v122, %v330
  %v332 = vpop.f32.mrb[0].mxu0
  %333 = vmatprep.mubr.bf16.mxu0 0
  %334 = vmatmul.mubr.bf16.gmra.mrb[0].mxu0 %v156
  %v335 = vpop.f32.mrb[0].mxu0
  %v336 = vadd.f32 %v122, %v335
  %v337 = vpop.f32.mrb[0].mxu0
  %v338 = vpop.f32.mrb[0].mxu0
  %v339 = vadd.f32 %v122, %v338
  %v340 = vpop.f32.mrb[0].mxu0
  %341 = vmatprep.mubr.bf16.mxu0 0
  %342 = vmatmul.mubr.bf16.gmra.mrb[0].mxu0 %v159
  %v343 = vpop.f32.mrb[0].mxu0
  %v344 = vadd.f32 %v122, %v343
  %v345 = vpop.f32.mrb[0].mxu0
  %v346 = vpop.f32.mrb[0].mxu0
  %v347 = vadd.f32 %v122, %v346
  %v348 = vpop.f32.mrb[0].mxu0
  %349 = vmatprep.mubr.bf16.mxu0 0
  %350 = vmatmul.mubr.bf16.gmra.mrb[0].mxu0 %v162
  %v351 = vpop.f32.mrb[0].mxu0
  %v352 = vadd.f32 %v122, %v351
  %v353 = vpop.f32.mrb[0].mxu0
  %v354 = vpop.f32.mrb[0].mxu0
  %v355 = vadd.f32 %v122, %v354
  %v356 = vpop.f32.mrb[0].mxu0
  %357 = vmatprep.mubr.bf16.mxu0 0
  %358 = vmatmul.mubr.bf16.gmra.mrb[0].mxu0 %v165
  %v359 = vpop.f32.mrb[0].mxu0
  %v360 = vadd.f32 %v122, %v359
  %v361 = vpop.f32.mrb[0].mxu0
  %v362 = vpop.f32.mrb[0].mxu0
  %v363 = vadd.f32 %v122, %v362
  %v364 = vpop.f32.mrb[0].mxu0
  %365 = vmatprep.mubr.bf16.mxu0 0
  %366 = vmatmul.mubr.bf16.gmra.mrb[0].mxu0 %v168
  %v367 = vpop.f32.mrb[0].mxu0
  %v368 = vadd.f32 %v122, %v367
  %v369 = vpop.f32.mrb[0].mxu0
  %v370 = vpop.f32.mrb[0].mxu0
  %v371 = vadd.f32 %v122, %v370
  %v372 = vpop.f32.mrb[0].mxu0
  %373 = vmatprep.mubr.bf16.mxu0 0
  %374 = vmatmul.mubr.bf16.gmra.mrb[0].mxu0 %v171
  %v375 = vpop.f32.mrb[0].mxu0
  %v376 = vadd.f32 %v122, %v375
  %v377 = vpop.f32.mrb[0].mxu0
  %v378 = vpop.f32.mrb[0].mxu0
  %v379 = vadd.f32 %v122, %v378
  %v380 = vpop.f32.mrb[0].mxu0
  %381 = vmatprep.mubr.bf16.mxu0 0
  %382 = vmatmul.mubr.bf16.gmra.mrb[0].mxu0 %v174
  %v383 = vpop.f32.mrb[0].mxu0
  %v384 = vadd.f32 %v122, %v383
  %v385 = vpop.f32.mrb[0].mxu0
  %v386 = vpop.f32.mrb[0].mxu0
  %v387 = vadd.f32 %v122, %v386
  %v388 = vpop.f32.mrb[0].mxu0
  %389 = vmatprep.mubr.bf16.mxu0 0
  %390 = vmatmul.mubr.bf16.gmra.mrb[0].mxu0 %v177
  %v391 = vpop.f32.mrb[0].mxu0
  %v392 = vadd.f32 %v122, %v391
  %v393 = vpop.f32.mrb[0].mxu0
  %v394 = vpop.f32.mrb[0].mxu0
  %v395 = vadd.f32 %v122, %v394
  %v396 = vpop.f32.mrb[0].mxu0
  %397 = vmatprep.mubr.bf16.mxu0 0
  %398 = vmatmul.mubr.bf16.gmra.mrb[0].mxu0 %v180
  %v399 = vpop.f32.mrb[0].mxu0
  %v400 = vadd.f32 %v122, %v399
  %v401 = vpop.f32.mrb[0].mxu0
  %v402 = vpop.f32.mrb[0].mxu0
  %v403 = vadd.f32 %v122, %v402
  %v404 = vpop.f32.mrb[0].mxu0
  %405 = vmatprep.mubr.bf16.mxu0 0
  %406 = vmatmul.mubr.bf16.gmra.mrb[0].mxu0 %v183
  %v407 = vpop.f32.mrb[0].mxu0
  %v408 = vadd.f32 %v122, %v407
  %v409 = vpop.f32.mrb[0].mxu0
  %v410 = vpop.f32.mrb[0].mxu0
  %v411 = vadd.f32 %v122, %v410
  %v412 = vpop.f32.mrb[0].mxu0
  %413 = vmatprep.mubr.bf16.mxu0 0
  %414 = vmatmul.mubr.bf16.gmra.mrb[0].mxu0 %v186
  %v415 = vpop.f32.mrb[0].mxu0
  %v416 = vadd.f32 %v122, %v415
  %v417 = vpop.f32.mrb[0].mxu0
  %v418 = vpop.f32.mrb[0].mxu0
  %v419 = vadd.f32 %v122, %v418
  %v420 = vpop.f32.mrb[0].mxu0
  %421 = vmatprep.mubr.bf16.mxu0 0
  %422 = vmatmul.mubr.bf16.gmra.mrb[0].mxu0 %v189
  %v423 = vpop.f32.mrb[0].mxu0
  %v424 = vadd.f32 %v122, %v423
  %v425 = vpop.f32.mrb[0].mxu0
  %v426 = vpop.f32.mrb[0].mxu0
  %v427 = vadd.f32 %v122, %v426
  %v428 = vpop.f32.mrb[0].mxu0
  %429 = vmatprep.mubr.bf16.mxu0 0
  %430 = vmatmul.mubr.bf16.gmra.mrb[0].mxu0 %v192
  %v431 = vpop.f32.mrb[0].mxu0
  %v432 = vadd.f32 %v122, %v431
  %v433 = vpop.f32.mrb[0].mxu0
  %v434 = vpop.f32.mrb[0].mxu0
  %v435 = vadd.f32 %v122, %v434
  %v436 = vpop.f32.mrb[0].mxu0
  %437 = vmatprep.mubr.bf16.mxu0 0
  %438 = vmatmul.mubr.bf16.gmra.mrb[0].mxu0 %v195
  %v439 = vpop.f32.mrb[0].mxu0
  %v440 = vadd.f32 %v122, %v439
  %v441 = vpop.f32.mrb[0].mxu0
  %v442 = vpop.f32.mrb[0].mxu0
  %v443 = vadd.f32 %v122, %v442
  %v444 = vpop.f32.mrb[0].mxu0
  %445 = vmatprep.mubr.bf16.mxu0 0
  %446 = vmatmul.mubr.bf16.gmra.mrb[0].mxu0 %v198
  %v447 = vpop.f32.mrb[0].mxu0
  %v448 = vadd.f32 %v122, %v447
  %v449 = vpop.f32.mrb[0].mxu0
  %v450 = vpop.f32.mrb[0].mxu0
  %v451 = vadd.f32 %v122, %v450
  %v452 = vpop.f32.mrb[0].mxu0
  %453 = vmatprep.mubr.bf16.mxu0 0
  %454 = vmatmul.mubr.bf16.gmra.mrb[0].mxu0 %v201
  %v455 = vpop.f32.mrb[0].mxu0
  %v456 = vadd.f32 %v122, %v455
  %v457 = vpop.f32.mrb[0].mxu0
  %v458 = vpop.f32.mrb[0].mxu0
  %v459 = vadd.f32 %v122, %v458
  %v460 = vpop.f32.mrb[0].mxu0
  %461 = vmatprep.mubr.bf16.mxu0 0
  %462 = vmatmul.mubr.bf16.gmra.mrb[0].mxu0 %v204
  %v463 = vpop.f32.mrb[0].mxu0
  %v464 = vadd.f32 %v122, %v463
  %v465 = vpop.f32.mrb[0].mxu0
  %v466 = vpop.f32.mrb[0].mxu0
  %v467 = vadd.f32 %v122, %v466
  %v468 = vpop.f32.mrb[0].mxu0
  %469 = vmatprep.mubr.bf16.mxu0 0
  %470 = vmatmul.mubr.bf16.gmra.mrb[0].mxu0 %v207
  %v471 = vpop.f32.mrb[0].mxu0
  %v472 = vadd.f32 %v122, %v471
  %v473 = vpop.f32.mrb[0].mxu0
  %v474 = vpop.f32.mrb[0].mxu0
  %v475 = vadd.f32 %v122, %v474
  %v476 = vpop.f32.mrb[0].mxu0
  %477 = vmatprep.mubr.bf16.mxu0 0
  %478 = vmatmul.mubr.bf16.gmra.mrb[0].mxu0 %v210
  %v479 = vpop.f32.mrb[0].mxu0
  %v480 = vadd.f32 %v122, %v479
  %v481 = vpop.f32.mrb[0].mxu0
  %v482 = vpop.f32.mrb[0].mxu0
  %v483 = vadd.f32 %v122, %v482
  %v484 = vpop.f32.mrb[0].mxu0
  %485 = vmatprep.mubr.bf16.mxu0 0
  %486 = vmatmul.mubr.bf16.gmra.mrb[0].mxu0 %v213
  %v487 = vpop.f32.mrb[0].mxu0
  %v488 = vadd.f32 %v122, %v487
  %v489 = vpop.f32.mrb[0].mxu0
  %v490 = vpop.f32.mrb[0].mxu0
  %v491 = vadd.f32 %v122, %v490
  %v492 = vpop.f32.mrb[0].mxu0
  %493 = vmatprep.mubr.bf16.mxu0 0
  %494 = vmatmul.mubr.bf16.gmra.mrb[0].mxu0 %v216
  %v495 = vpop.f32.mrb[0].mxu0
  %v496 = vadd.f32 %v122, %v495
  %v497 = vpop.f32.mrb[0].mxu0
  %v498 = vpop.f32.mrb[0].mxu0
  %v499 = vadd.f32 %v122, %v498
  %v500 = vpop.f32.mrb[0].mxu0
  %501 = vmatprep.mubr.bf16.mxu0 0
  %502 = vmatmul.mubr.bf16.gmra.mrb[0].mxu0 %v219
  %v503 = vpop.f32.mrb[0].mxu0
  %v504 = vadd.f32 %v122, %v503
  %v505 = vpop.f32.mrb[0].mxu0
  %v506 = vpop.f32.mrb[0].mxu0
  %v507 = vadd.f32 %v122, %v506
  %v508 = vpop.f32.mrb[0].mxu0
  %509 = vdwg.mxu0
  %510 = vst.msk [vmem:[%s3] sm:$0xff] %vm124, %v256
  %511 = vst.msk [vmem:[%s3 + $0x8] sm:$0xff] %vm124, %v259
  %512 = vst.msk [vmem:[%s3 + $0x10] sm:$0xff] %vm124, %v264
  %513 = vst.msk [vmem:[%s3 + $0x18] sm:$0xff] %vm124, %v267
  %514 = vst.msk [vmem:[%s3 + $0x20] sm:$0xff] %vm124, %v272
  %515 = vst.msk [vmem:[%s3 + $0x28] sm:$0xff] %vm124, %v275
  %516 = vst.msk [vmem:[%s3 + $0x30] sm:$0xff] %vm124, %v280
  %517 = vst.msk [vmem:[%s3 + $0x38] sm:$0xff] %vm124, %v283
  %518 = vst.msk [vmem:[%s3 + $0x40] sm:$0xff] %vm124, %v288
  %519 = vst.msk [vmem:[%s3 + $0x48] sm:$0xff] %vm124, %v291
  %520 = vst.msk [vmem:[%s3 + $0x50] sm:$0xff] %vm124, %v296
  %521 = vst.msk [vmem:[%s3 + $0x58] sm:$0xff] %vm124, %v299
  %522 = vst.msk [vmem:[%s3 + $0x60] sm:$0xff] %vm124, %v304
  %523 = vst.msk [vmem:[%s3 + $0x68] sm:$0xff] %vm124, %v307
  %524 = vst.msk [vmem:[%s3 + $0x70] sm:$0xff] %vm124, %v312
  %525 = vst.msk [vmem:[%s3 + $0x78] sm:$0xff] %vm124, %v315
  %526 = vst.msk [vmem:[%s3 + $0x80] sm:$0xff] %vm124, %v320
  %527 = vst.msk [vmem:[%s3 + $0x88] sm:$0xff] %vm124, %v323
  %528 = vst.msk [vmem:[%s3 + $0x90] sm:$0xff] %vm124, %v328
  %529 = vst.msk [vmem:[%s3 + $0x98] sm:$0xff] %vm124, %v331
  %530 = vst.msk [vmem:[%s3 + $0xa0] sm:$0xff] %vm124, %v336
  %531 = vst.msk [vmem:[%s3 + $0xa8] sm:$0xff] %vm124, %v339
  %532 = vst.msk [vmem:[%s3 + $0xb0] sm:$0xff] %vm124, %v344
  %533 = vst.msk [vmem:[%s3 + $0xb8] sm:$0xff] %vm124, %v347
  %534 = vst.msk [vmem:[%s3 + $0xc0] sm:$0xff] %vm124, %v352
  %535 = vst.msk [vmem:[%s3 + $0xc8] sm:$0xff] %vm124, %v355
  %536 = vst.msk [vmem:[%s3 + $0xd0] sm:$0xff] %vm124, %v360
  %537 = vst.msk [vmem:[%s3 + $0xd8] sm:$0xff] %vm124, %v363
  %538 = vst.msk [vmem:[%s3 + $0xe0] sm:$0xff] %vm124, %v368
  %539 = vst.msk [vmem:[%s3 + $0xe8] sm:$0xff] %vm124, %v371
  %540 = vst.msk [vmem:[%s3 + $0xf0] sm:$0xff] %vm124, %v376
  %541 = vst.msk [vmem:[%s3 + $0xf8] sm:$0xff] %vm124, %v379
  %542 = vst.msk [vmem:[%s3 + $0x100] sm:$0xff] %vm124, %v384
  %543 = vst.msk [vmem:[%s3 + $0x108] sm:$0xff] %vm124, %v387
  %544 = vst.msk [vmem:[%s3 + $0x110] sm:$0xff] %vm124, %v392
  %545 = vst.msk [vmem:[%s3 + $0x118] sm:$0xff] %vm124, %v395
  %546 = vst.msk [vmem:[%s3 + $0x120] sm:$0xff] %vm124, %v400
  %547 = vst.msk [vmem:[%s3 + $0x128] sm:$0xff] %vm124, %v403
  %548 = vst.msk [vmem:[%s3 + $0x130] sm:$0xff] %vm124, %v408
  %549 = vst.msk [vmem:[%s3 + $0x138] sm:$0xff] %vm124, %v411
  %550 = vst.msk [vmem:[%s3 + $0x140] sm:$0xff] %vm124, %v416
  %551 = vst.msk [vmem:[%s3 + $0x148] sm:$0xff] %vm124, %v419
  %552 = vst.msk [vmem:[%s3 + $0x150] sm:$0xff] %vm124, %v424
  %553 = vst.msk [vmem:[%s3 + $0x158] sm:$0xff] %vm124, %v427
  %554 = vst.msk [vmem:[%s3 + $0x160] sm:$0xff] %vm124, %v432
  %555 = vst.msk [vmem:[%s3 + $0x168] sm:$0xff] %vm124, %v435
  %556 = vst.msk [vmem:[%s3 + $0x170] sm:$0xff] %vm124, %v440
  %557 = vst.msk [vmem:[%s3 + $0x178] sm:$0xff] %vm124, %v443
  %558 = vst.msk [vmem:[%s3 + $0x180] sm:$0xff] %vm124, %v448
  %559 = vst.msk [vmem:[%s3 + $0x188] sm:$0xff] %vm124, %v451
  %560 = vst.msk [vmem:[%s3 + $0x190] sm:$0xff] %vm124, %v456
  %561 = vst.msk [vmem:[%s3 + $0x198] sm:$0xff] %vm124, %v459
  %562 = vst.msk [vmem:[%s3 + $0x1a0] sm:$0xff] %vm124, %v464
  %563 = vst.msk [vmem:[%s3 + $0x1a8] sm:$0xff] %vm124, %v467
  %564 = vst.msk [vmem:[%s3 + $0x1b0] sm:$0xff] %vm124, %v472
  %565 = vst.msk [vmem:[%s3 + $0x1b8] sm:$0xff] %vm124, %v475
  %566 = vst.msk [vmem:[%s3 + $0x1c0] sm:$0xff] %vm124, %v480
  %567 = vst.msk [vmem:[%s3 + $0x1c8] sm:$0xff] %vm124, %v483
  %568 = vst.msk [vmem:[%s3 + $0x1d0] sm:$0xff] %vm124, %v488
  %569 = vst.msk [vmem:[%s3 + $0x1d8] sm:$0xff] %vm124, %v491
  %570 = vst.msk [vmem:[%s3 + $0x1e0] sm:$0xff] %vm124, %v496
  %571 = vst.msk [vmem:[%s3 + $0x1e8] sm:$0xff] %vm124, %v499
  %572 = vst.msk [vmem:[%s3 + $0x1f0] sm:$0xff] %vm124, %v504
  %573 = vst.msk [vmem:[%s3 + $0x1f8] sm:$0xff] %vm124, %v507
  // Predicated region
  $region14: #{tpu_custom_call.1} parent=0 // pred_check
    _
  $region15: #{tpu_custom_call.1} parent=0 // pred_check_branch
    %575 = sbr.rel (0) target = $region17
  $region16: #{tpu_custom_call.1} parent=0 // pred_region
    _
  $region17: #{tpu_custom_call.1} parent=0 // pred_fallthru
    _
  // Predicated region
  $region18: #{tpu_custom_call.1} parent=0 // pred_check
    _
  $region19: #{tpu_custom_call.1} parent=0 // pred_check_branch
    %577 = sbr.rel (0) target = $region21
  $region20: #{tpu_custom_call.1} parent=0 // pred_region
    _
  $region21: #{tpu_custom_call.1} parent=0 // pred_fallthru
    _

</llo_original>
